<compile_context>
chip_gen: v5e
topology: v5e:2x2
jax: 0.10.0
libtpu: 0.0.40
codegen_flags: <defaults>
</compile_context>

<pallas_src>
import functools

import numpy as np
import jax
import jax.numpy as jnp
from jax.experimental import pallas as pl
from jax.experimental.pallas import tpu as pltpu


def _sigmoid_f32(z):
    z = np.float32(z)
    return np.float32(1.0) / (np.float32(1.0) + np.exp(-z))


def _noisy_and_kernel(x_ref, o_ref, *, alpha, beta, t12, scale, use_mxu_sum, cols):
    x = x_ref[...]                                        # (TM, cols), native dtype
    if use_mxu_sum:
        # Row sum on the (idle) MXU: every output lane holds the row sum,
        # accumulated in f32.  Exact for bf16/fp8/int8 inputs.
        ones = jnp.ones((cols, 128), dtype=x.dtype)
        s = jnp.dot(x, ones, preferred_element_type=jnp.float32)[:, :1]
    else:
        # Fused upcast + reduce: accumulate the row sum in f32 without
        # materializing a full f32 copy of the block.
        s = jnp.sum(x, axis=1, keepdims=True, dtype=jnp.float32)
    t11 = jax.nn.sigmoid(s * alpha + beta)                # == sigmoid(a*(mean-b))
    o_ref[...] = ((t11 - t12) * scale).astype(o_ref.dtype)


def _vmem_limit_bytes():
    phys = None
    try:
        info = pltpu.get_tpu_info()
        phys = getattr(info, "vmem_capacity_bytes", None)
    except Exception:
        phys = None
    if not phys:
        phys = 64 * 1024 * 1024          # conservative fallback: v7x per-TC VMEM
    return int(min(3 * phys // 4, 100 * 1024 * 1024))


def noisy_and(x, a=10.0, b=3.0):
    """x: (N, C, H, W) -> (N, C, 1, 1), same dtype as x."""
    N, C, H, W = x.shape
    rows, cols = N * C, H * W
    x2d = x.reshape(rows, cols)           # free view; keep native dtype for minimal HBM traffic

    itemsize = jnp.dtype(x2d.dtype).itemsize
    sub = 8 * max(1, 4 // itemsize)       # sublane packing of the row axis (8 f32 / 16 bf16 / ...)
    cols_pad = pl.cdiv(cols, 128) * 128   # VMEM tiles are lane-padded to 128

    # --- VMEM-aware row-tile sizing -----------------------------------------
    vmem_limit = _vmem_limit_bytes()
    headroom = 6 * 1024 * 1024            # internal scratch, in-kernel constants, slack
    # Resident at pipeline depth 2: 2 input blocks (tm x cols_pad) and
    # 2 output blocks (tm x 1, lane-padded to tm x 128).
    per_row_bytes = 2 * (cols_pad * itemsize + 128 * itemsize)
    tm_budget = max(sub, ((vmem_limit - headroom) // per_row_bytes) // sub * sub)
    rows_pad = pl.cdiv(rows, sub) * sub
    # Keep >= ~8 grid steps on large inputs so both v7x TensorCores stream and
    # each still has blocks to double-buffer.
    tm_steps = pl.cdiv(pl.cdiv(rows, 8), sub) * sub
    tm = max(sub, min(tm_budget, rows_pad, tm_steps))
    grid = (pl.cdiv(rows, tm),)

    # --- (a, b)-only constants, computed in float32 to match the reference ---
    a32, b32 = np.float32(a), np.float32(b)
    t12 = _sigmoid_f32(-a32 * b32)
    t21 = _sigmoid_f32(a32 * (np.float32(1.0) - b32))
    t22 = _sigmoid_f32(-a32 * b32)
    scale = np.float32(1.0) / (t21 - t22)          # fold the division into one multiply
    alpha = a32 / np.float32(cols)                 # fold mean + a*(mean-b) => sum*alpha + beta
    beta = -a32 * b32

    # MXU row-sum only for sub-32-bit dtypes (exact with f32 accumulation).
    # f32 inputs with small H*W could also use it on v7x, but would need
    # precision=HIGHEST to preserve f32 accuracy, so they stay on the VPU/XLU path.
    use_mxu_sum = itemsize < 4

    kernel = functools.partial(
        _noisy_and_kernel,
        alpha=float(alpha), beta=float(beta), t12=float(t12), scale=float(scale),
        use_mxu_sum=use_mxu_sum, cols=cols,
    )

    out2d = pl.pallas_call(
        kernel,
        out_shape=jax.ShapeDtypeStruct((rows, 1), x2d.dtype),
        grid_spec=pltpu.PrefetchScalarGridSpec(
            num_scalar_prefetch=0,
            grid=grid,
            in_specs=[pl.BlockSpec((tm, cols), lambda i: (i, 0))],
            out_specs=pl.BlockSpec((tm, 1), lambda i: (i, 0)),
        ),
        compiler_params=pltpu.CompilerParams(
            dimension_semantics=("parallel",),
            vmem_limit_bytes=vmem_limit,
        ),
        cost_estimate=pl.CostEstimate(
            flops=2 * rows * cols,
            transcendentals=rows,
            bytes_accessed=rows * cols * itemsize + rows * itemsize,
        ),
    )(x2d)

    return out2d.reshape(N, C, 1, 1)


def noisy_and_ref(x, a=10.0, b=3.0):
    xf = x.astype(jnp.float32)
    mean = jnp.mean(xf, axis=(2, 3))
    t11 = jax.nn.sigmoid(a * (mean - b))
    t12 = jax.nn.sigmoid(jnp.float32(-a * b))
    t21 = jax.nn.sigmoid(jnp.float32(a * (1.0 - b)))
    t22 = jax.nn.sigmoid(jnp.float32(-a * b))
    ans = (t11 - t12) / (t21 - t22)
    return ans.reshape(x.shape[0], x.shape[1], 1, 1).astype(x.dtype)


if __name__ == "__main__":
    key = jax.random.PRNGKey(0)

    # Primary check: f32, H*W = 256 (VPU/XLU row-sum path).
    x = jax.random.uniform(key, (2, 4, 16, 16), dtype=jnp.float32) * 6.0
    out = jax.block_until_ready(noisy_and(x))
    ref = noisy_and_ref(x)
    assert out.shape == (2, 4, 1, 1), out.shape
    assert jnp.allclose(out, ref, rtol=1e-5, atol=1e-6), (out, ref)

    # Secondary check: bf16 input exercises the MXU row-sum path.
    xb = (jax.random.uniform(jax.random.PRNGKey(1), (2, 4, 16, 16),
                             dtype=jnp.float32) * 6.0).astype(jnp.bfloat16)
    outb = jax.block_until_ready(noisy_and(xb))
    refb = noisy_and_ref(xb)
    assert jnp.allclose(outb.astype(jnp.float32), refb.astype(jnp.float32),
                        rtol=2e-2, atol=1e-3), (outb, refb)

    print("KERNEL_OK")
</pallas_src>

<mosaic_0001>
module attributes {stable_mosaic.version = 11 : i64} {
  func.func @_noisy_and_kernel(%arg0: i32, %arg1: memref<8x256xf32, #tpu.memory_space<vmem>>, %arg2: memref<8x1xf32, #tpu.memory_space<vmem>>) attributes {dimension_semantics = [#tpu.dimension_semantics<parallel>], iteration_bounds = array<i64: 1>, scalar_prefetch = 0 : i64, scratch_operands = 0 : i64, tpu.core_type = #tpu.core_type<tc>, window_params = [{transform_indices = @transform_0, window_bounds = array<i64: 8, 256>}, {transform_indices = @transform_1, window_bounds = array<i64: 8, 1>}]} {
    %c0 = arith.constant 0 : index
    %c0_0 = arith.constant 0 : index
    %0 = vector.load %arg1[%c0, %c0_0] : memref<8x256xf32, #tpu.memory_space<vmem>>, vector<8x256xf32>
    %cst = arith.constant dense<0.000000e+00> : vector<8xf32>
    %1 = vector.multi_reduction <add>, %0, %cst [1] : vector<8x256xf32> to vector<8xf32>
    %2 = vector.shape_cast %1 : vector<8xf32> to vector<8x1xf32>
    %cst_1 = arith.constant 3.906250e-02 : f32
    %3 = vector.broadcast %cst_1 : f32 to vector<8x1xf32>
    %4 = arith.mulf %2, %3 : vector<8x1xf32>
    %cst_2 = arith.constant -3.000000e+01 : f32
    %5 = vector.broadcast %cst_2 : f32 to vector<8x1xf32>
    %6 = arith.addf %4, %5 : vector<8x1xf32>
    %7 = arith.negf %6 : vector<8x1xf32>
    %8 = math.exp %7 : vector<8x1xf32>
    %cst_3 = arith.constant 1.000000e+00 : f32
    %9 = vector.broadcast %cst_3 : f32 to vector<8x1xf32>
    %10 = arith.addf %9, %8 : vector<8x1xf32>
    %11 = arith.divf %9, %10 : vector<8x1xf32>
    %cst_4 = arith.constant 9.35762358E-14 : f32
    %12 = vector.broadcast %cst_4 : f32 to vector<8x1xf32>
    %13 = arith.subf %11, %12 : vector<8x1xf32>
    %cst_5 = arith.constant 0x4DE75AF5 : f32
    %14 = vector.broadcast %cst_5 : f32 to vector<8x1xf32>
    %15 = arith.mulf %13, %14 : vector<8x1xf32>
    %c0_6 = arith.constant 0 : index
    %c0_7 = arith.constant 0 : index
    %16 = vector.load %arg2[%c0_6, %c0_7] : memref<8x1xf32, #tpu.memory_space<vmem>>, vector<8x1xf32>
    tpu.vector_store %arg2[%c0_6, %c0_7], %15 {strides = array<i32>} : memref<8x1xf32, #tpu.memory_space<vmem>>, vector<8x1xf32>,
    return
  }
  func.func @transform_0(%arg0: i32) -> (i32, i32) {
    %c0_i32 = arith.constant 0 : i32
    %c0_i32_0 = arith.constant 0 : i32
    return %arg0, %c0_i32 : i32, i32
  }
  func.func @transform_1(%arg0: i32) -> (i32, i32) {
    %c0_i32 = arith.constant 0 : i32
    %c0_i32_0 = arith.constant 0 : i32
    return %arg0, %c0_i32 : i32, i32
  }
}

</mosaic_0001>

<llo_original>
// kernel: tpu_custom_call.1
$region0: #{tpu_custom_call.1}
  #allocation0 [shape = 'u32[]', space=smem, size = 0x4, offset = 0x4, fixed_abs, tag = 'smem constant byte address 0x4 - core index']
  #allocation1 [shape = 'u32[72,128]{1,0:T(1,128)}', space=vmem, size = 0x9000, scoped, tag = 'internal scratch']
  %s0 = inlined_call_operand.hbm [shape: f32[8,256], index: 0, kind: input, shape index: {}]
  %s1 = inlined_call_operand.vmem [shape: f32[8,1], index: 1, kind: output, shape index: {}]
  %s2 = sld [smem:[#allocation0]]
  $region18: #{tpu_custom_call.1} parent=0
    _
  %s4 = ssub.s32 1, %s2
  %s5 = scalar_select 0, %s4, %s2
  $region1: #{tpu_custom_call.1} parent=0
    #allocation2 [shape = 'u8[8192]{0}', space=vmem, size = 0x2000, scoped, tag = 'input window, operand 0, single buffered']
    #allocation3 [shape = 's32[1]{0}', space=sflag, size = 0x4, scoped, tag = 'scoped memory for tpu_custom_call.1']
    %6 = vsyncpa [#allocation3], 0
    // Predicated region
    $region2: #{tpu_custom_call.1} parent=1 // pred_check
      _
    $region3: #{tpu_custom_call.1} parent=1 // pred_check_branch
      %8 = sbr.rel (0) target = $region5
    $region4: #{tpu_custom_call.1} parent=1 // pred_region
      %10 = vsyncadd [#allocation3], 0
      %s12 = sshll.u32 %s0, 4
      %s13 = int_to_ptr.hbm [resolvable:$true] %s12
      %s14 = sshll.u32 [#allocation2], 4
      %s15 = int_to_ptr.vmem [resolvable:$true] %s14
      %17 = dma.hbm_to_vmem [thread:$0]  %s13, 256, %s15, [#allocation3]
    $region5: #{tpu_custom_call.1} parent=1 // pred_fallthru
      _
    // Predicated region
    $region6: #{tpu_custom_call.1} parent=1 // pred_check
      _
    $region7: #{tpu_custom_call.1} parent=1 // pred_check_branch
      %19 = sbr.rel (0) target = $region9
    $region8: #{tpu_custom_call.1} parent=1 // pred_region
      %21 = dma.done [#allocation3], 256
    $region9: #{tpu_custom_call.1} parent=1 // pred_fallthru
      _
    %v22 = vld [vmem:[#allocation2] sm:$0xff]
    %v23 = vld [vmem:[#allocation2 + $0x8] sm:$0xff]
    %v24 = vadd.f32 %v22, %v23
    %25 = vadd.xlane.f32.xlu0 %v24
    %v26 = vpop.xlane.xlu0 %25
    %v27 = vmul.f32 %v26, 0.0390625
    %v28 = vadd.f32 %v27, -30.0
    %v29 = vxor.u32 %v28, 2147483648
    %v30 = vmul.f32 %v29, 1.442695
    %v31 = vpow.pop %v30
    %v32 = vadd.f32 %v31, 1.0
    %v33 = vrcp.pop %v32
    %v34 = vmul.f32 %v32, %v33
    %v35 = vsub.f32 1.0, %v34
    %v36 = vmul.f32 %v33, %v35
    %v37 = vadd.f32 %v33, %v36
    %vm38 = vweird.f32 %v32
    %vm39 = vweird.f32 %v33
    %vm40 = vmor %vm38, %vm39
    %v41 = vsel %vm40, %v33, %v37
    %v42 = vand.u32 2147483647, %v32
    %vm43 = vcmp.eq.f32.partialorder %v42, 8.507059e+37
    %v44 = vand.u32 %v32, 2147483648
    %v45 = vor.u32 1.1754944e-38, %v44
    %v46 = vsel %vm43, %v45, %v41
    %v47 = vmul.f32 1.0, %v46
    %v48 = vsub.f32 %v47, 9.3576236e-14
    %v49 = vmul.f32 %v48, 4.8518723e+08
    %vm50 = vcmask 7168
    %51 = vst.msk [vmem:[%s1] sm:$0xff] %vm50, %v49
    // Predicated region
    $region10: #{tpu_custom_call.1} parent=1 // pred_check
      _
    $region11: #{tpu_custom_call.1} parent=1 // pred_check_branch
      %53 = sbr.rel (0) target = $region13
    $region12: #{tpu_custom_call.1} parent=1 // pred_region
      _
    $region13: #{tpu_custom_call.1} parent=1 // pred_fallthru
      _
    // Predicated region
    $region14: #{tpu_custom_call.1} parent=1 // pred_check
      _
    $region15: #{tpu_custom_call.1} parent=1 // pred_check_branch
      %55 = sbr.rel (0) target = $region17
    $region16: #{tpu_custom_call.1} parent=1 // pred_region
      _
    $region17: #{tpu_custom_call.1} parent=1 // pred_fallthru
      _
    %56 = vsyncpa [#allocation3], 1

</llo_original>
